<compile_context>
chip_gen: v5e
topology: v5e:2x2
jax: 0.10.0
libtpu: 0.0.40
codegen_flags: <defaults>
</compile_context>

<pallas_src>
import math

import jax
import jax.numpy as jnp
from jax.experimental import pallas as pl
from jax.experimental.pallas import tpu as pltpu

_LANE = 128


# ---------------------------------------------------------------------------
# Kernels
# ---------------------------------------------------------------------------

def _blockdiag_kernel(x_ref, w_ref, b_ref, o_ref):
    # x_ref: (Bt, Fb*I), w_ref: (Fb*I, Fb*O) block-diagonal, b_ref: (1, Fb*O)
    acc = jnp.dot(x_ref[...], w_ref[...], preferred_element_type=jnp.float32)
    o_ref[...] = (acc + b_ref[...].astype(jnp.float32)).astype(o_ref.dtype)


def _feature_major_kernel(x_ref, w_ref, b_ref, o_ref):
    # x_ref: (Fb, Bt, I), w_ref: (Fb, I, O), b_ref: (Fb, 1, O), o_ref: (Fb, Bt, O)
    acc = jax.lax.dot_general(
        x_ref[...], w_ref[...],
        dimension_numbers=(((2,), (1,)), ((0,), (0,))),
        preferred_element_type=jnp.float32)
    o_ref[...] = (acc + b_ref[...].astype(jnp.float32)).astype(o_ref.dtype)


# ---------------------------------------------------------------------------
# Sizing heuristics (padding-aware, generation-aware, dtype-aware)
# ---------------------------------------------------------------------------

def _sublane(dtype):
    return {4: 8, 2: 16, 1: 32}.get(jnp.dtype(dtype).itemsize, 8)


def _padded_bytes(rows, cols, dtype):
    """VMEM footprint of a (rows, cols) tile after (sublane, 128-lane) padding."""
    s = _sublane(dtype)
    pr = ((rows + s - 1) // s) * s
    pc = ((cols + _LANE - 1) // _LANE) * _LANE
    return pr * pc * jnp.dtype(dtype).itemsize


def _vmem_budget_and_limit():
    """(double-buffered working-set budget, vmem_limit_bytes) per TPU generation."""
    cap = None
    try:
        cap = int(getattr(pltpu.get_tpu_info(), "vmem_capacity_bytes", 0)) or None
    except Exception:
        cap = None
    if cap is None:
        cap = 64 * 1024 * 1024                  # conservative: v7x-class VMEM
    if cap >= 128 * 1024 * 1024:                # v5e / v6e: 128 MiB per TensorCore
        return 36 * 1024 * 1024, 100 * 1024 * 1024
    return 16 * 1024 * 1024, 48 * 1024 * 1024   # v7x: 64 MiB per TensorCore


def _divisors(m, scan_cap):
    cap = min(m, scan_cap)
    ds = [d for d in range(1, cap + 1) if m % d == 0]
    if m not in ds:
        ds.append(m)
    return ds


def _pick_feature_block(n, in_dim, out_dim, w_dtype, vmem_budget):
    """Smallest feature block whose flattened x/out tile widths satisfy the TPU
    (…, 128) block rule and whose block-diagonal weight tile stays modest.
    Returns None if no acceptable block exists (-> feature-major fallback)."""
    cands = []
    for d in _divisors(n, 4096):
        lane_ok = (d * in_dim) % _LANE == 0 and (d * out_dim) % _LANE == 0
        if d < n and not lane_ok:
            continue                              # illegal x2 / out2 block shape
        w_tile = _padded_bytes(d * in_dim, d * out_dim, w_dtype)
        if w_tile > min(vmem_budget // 3, 8 * 1024 * 1024):
            continue                              # weight tile would eat VMEM
        if d > 1 and not lane_ok and w_tile > 4 * 1024 * 1024:
            continue                              # full-n block-diag inflates weights too much
        cands.append(d)
    return min(cands) if cands else None


def _pick_batch_block(batch, fb, in_dim, out_dim, x_dtype, w_dtype, bias_dtype,
                      vmem_budget):
    s = _sublane(x_dtype)
    w_tile = _padded_bytes(fb * in_dim, fb * out_dim, w_dtype)
    b_tile = _padded_bytes(1, fb * out_dim, bias_dtype)

    def working_set(bt):                          # x2 + w + bias + out2, double buffered
        return 2 * (_padded_bytes(bt, fb * in_dim, x_dtype) + w_tile + b_tile
                    + _padded_bytes(bt, fb * out_dim, x_dtype))

    cands = sorted({d for d in _divisors(batch, 4096)
                    if d % s == 0 or d == batch})
    best = cands[0]
    for d in cands:                               # largest candidate that fits budget
        if working_set(d) <= vmem_budget:
            best = d
    return best


def _pick_blocks_feature_major(batch, n, in_dim, out_dim, x_dtype, w_dtype,
                               bias_dtype, vmem_budget):
    s = _sublane(x_dtype)
    bt_cands = sorted({d for d in _divisors(batch, 1024)
                       if d % s == 0 or d == batch})

    def working_set(fb, bt):
        return 2 * fb * (_padded_bytes(bt, in_dim, x_dtype)
                         + _padded_bytes(in_dim, out_dim, w_dtype)
                         + _padded_bytes(1, out_dim, bias_dtype)
                         + _padded_bytes(bt, out_dim, x_dtype))

    bt = bt_cands[0]
    for d in bt_cands:
        if working_set(1, d) <= vmem_budget:
            bt = d
    fb = 1
    for d in _divisors(n, 256):
        if working_set(d, bt) <= vmem_budget:
            fb = d
    return fb, bt


# ---------------------------------------------------------------------------
# Wrappers
# ---------------------------------------------------------------------------

def _nlinear_blockdiag(x, weight, bias, fb, batch_block, vmem_budget, vmem_limit):
    """Fast path: native layout end-to-end, block-diagonal per-group weights."""
    batch, n, in_dim = x.shape
    out_dim = weight.shape[-1]
    groups = n // fb

    bt = batch_block if batch_block is not None else _pick_batch_block(
        batch, fb, in_dim, out_dim, x.dtype, weight.dtype, bias.dtype, vmem_budget)
    assert batch % bt == 0, "batch_block must divide batch"

    # Metadata-only reshapes: x / out keep their native HBM layout (no HBM pass).
    x2 = x.reshape(batch, n * in_dim)
    bias2 = bias.reshape(1, n * out_dim)

    # Per-group block-diagonal weights (small, built once per call in XLA):
    #   w_bd[g, f*I + i, h*O + o] = weight[g*fb + f, i, o] * (f == h)
    w_g = weight.reshape(groups, fb, in_dim, out_dim)
    eye = jnp.eye(fb, dtype=weight.dtype)
    w_bd = (w_g[:, :, :, None, :] * eye[:, None, :, None]).reshape(
        groups, fb * in_dim, fb * out_dim)

    grid = (groups, batch // bt)

    out2 = pl.pallas_call(
        _blockdiag_kernel,
        out_shape=jax.ShapeDtypeStruct((batch, n * out_dim), x.dtype),
        grid_spec=pltpu.PrefetchScalarGridSpec(
            num_scalar_prefetch=0,
            grid=grid,
            in_specs=[
                # x: new tile every step (contiguous, lane-dense).
                pl.BlockSpec((bt, fb * in_dim), lambda f, b: (b, f)),
                # weight: constant in b -> fetched once per feature block.
                pl.BlockSpec((None, fb * in_dim, fb * out_dim),
                             lambda f, b: (f, 0, 0)),
                # bias: constant in b -> fetched once per feature block.
                pl.BlockSpec((1, fb * out_dim), lambda f, b: (0, f)),
            ],
            out_specs=pl.BlockSpec((bt, fb * out_dim), lambda f, b: (b, f)),
        ),
        compiler_params=pltpu.CompilerParams(
            # feature axis parallel (megacore splits features; each TC reuses
            # its own weight tiles across the inner, sequential batch axis).
            dimension_semantics=("parallel", "arbitrary"),
            vmem_limit_bytes=vmem_limit,
        ),
    )(x2, w_bd, bias2)

    return out2.reshape(batch, n, out_dim)


def _nlinear_feature_major(x, weight, bias, feature_block, batch_block,
                           vmem_budget, vmem_limit):
    """Fallback for awkward shapes: feature-major batched matmul (pays two
    wrapper transposes, i.e. extra HBM passes, but lowers for any shape)."""
    batch, n, in_dim = x.shape
    out_dim = weight.shape[-1]

    fb_auto, bt_auto = _pick_blocks_feature_major(
        batch, n, in_dim, out_dim, x.dtype, weight.dtype, bias.dtype, vmem_budget)
    fb = feature_block if (feature_block is not None and n % feature_block == 0) else fb_auto
    bt = batch_block if (batch_block is not None and batch % batch_block == 0) else bt_auto

    # TODO(synk): for very large in_dim/out_dim add a K / out_dim grid axis with
    # a VMEM f32 accumulator instead of relying on small feature blocks.

    x_fm = jnp.transpose(x, (1, 0, 2))            # (n, batch, in_dim)  (HBM pass)
    b_fm = bias.reshape(n, 1, out_dim)

    grid = (n // fb, batch // bt)

    out_fm = pl.pallas_call(
        _feature_major_kernel,
        out_shape=jax.ShapeDtypeStruct((n, batch, out_dim), x.dtype),
        grid_spec=pltpu.PrefetchScalarGridSpec(
            num_scalar_prefetch=0,
            grid=grid,
            in_specs=[
                pl.BlockSpec((fb, bt, in_dim), lambda f, b: (f, b, 0)),
                pl.BlockSpec((fb, in_dim, out_dim), lambda f, b: (f, 0, 0)),
                pl.BlockSpec((fb, 1, out_dim), lambda f, b: (f, 0, 0)),
            ],
            out_specs=pl.BlockSpec((fb, bt, out_dim), lambda f, b: (f, b, 0)),
        ),
        compiler_params=pltpu.CompilerParams(
            dimension_semantics=("parallel", "arbitrary"),
            vmem_limit_bytes=vmem_limit,
        ),
    )(x_fm, weight, b_fm)

    return jnp.transpose(out_fm, (1, 0, 2))       # back to (batch, n, out_dim)


def nlinear_pallas(x, weight, bias, *, feature_block=None, batch_block=None,
                   compute_dtype=None):
    """x: (batch, n, in_dim); weight: (n, in_dim, out_dim); bias: (n, out_dim).

    Returns (batch, n, out_dim) with out[b, f] = x[b, f] @ weight[f] + bias[f].
    Output dtype follows x (or compute_dtype if given).
    """
    batch, n, in_dim = x.shape
    n_w, in_w, out_dim = weight.shape
    assert (n_w, in_w) == (n, in_dim), "weight shape mismatch"
    assert bias.shape == (n, out_dim), "bias shape mismatch"

    if compute_dtype is not None:
        x = x.astype(compute_dtype)
        weight = weight.astype(compute_dtype)

    vmem_budget, vmem_limit = _vmem_budget_and_limit()

    fb = feature_block
    if fb is None:
        fb = _pick_feature_block(n, in_dim, out_dim, weight.dtype, vmem_budget)

    use_fast = (
        fb is not None and n % fb == 0
        and (fb == n
             or ((fb * in_dim) % _LANE == 0 and (fb * out_dim) % _LANE == 0)))

    if use_fast:
        return _nlinear_blockdiag(x, weight, bias, fb, batch_block,
                                  vmem_budget, vmem_limit)
    return _nlinear_feature_major(x, weight, bias, feature_block, batch_block,
                                  vmem_budget, vmem_limit)


def init_nlinear_params(key, in_dim, out_dim, n, dtype=jnp.float32):
    """Matches nn.init.uniform_(-1/sqrt(in_dim), 1/sqrt(in_dim))."""
    bound = 1.0 / math.sqrt(in_dim)
    kw, kb = jax.random.split(key)
    weight = jax.random.uniform(kw, (n, in_dim, out_dim), dtype, -bound, bound)
    bias = jax.random.uniform(kb, (n, out_dim), dtype, -bound, bound)
    return weight, bias


def _reference(x, weight, bias):
    return jnp.einsum("bfi,fio->bfo", x, weight) + bias[None, :, :]


if __name__ == "__main__":
    key = jax.random.PRNGKey(0)

    # NOTE: TPU matmuls (both kernel and XLA reference) may run with reduced
    # (bf16) multiply precision by default, hence the loose-ish tolerances.

    # --- 1) fast path, heuristic blocks -------------------------------------
    batch, n, in_dim, out_dim = 32, 24, 16, 32
    kx, kp, key = jax.random.split(key, 3)
    x = jax.random.normal(kx, (batch, n, in_dim), jnp.float32)
    weight, bias = init_nlinear_params(kp, in_dim, out_dim, n)
    ref = _reference(x, weight, bias)

    out = jax.block_until_ready(nlinear_pallas(x, weight, bias))
    assert out.shape == (batch, n, out_dim)
    assert jnp.allclose(out, ref, atol=2e-2, rtol=2e-2)

    # --- 2) fast path, explicit small blocks (exercises both grid axes) -----
    out2 = jax.block_until_ready(
        nlinear_pallas(x, weight, bias, feature_block=8, batch_block=8))
    assert jnp.allclose(out2, ref, atol=2e-2, rtol=2e-2)

    # --- 3) bf16 compute (f32 MXU accumulation), heuristic blocks -----------
    out_bf16 = jax.block_until_ready(
        nlinear_pallas(x, weight, bias, compute_dtype=jnp.bfloat16))
    assert out_bf16.dtype == jnp.bfloat16
    assert jnp.allclose(out_bf16.astype(jnp.float32), ref, atol=1e-1, rtol=1e-1)

    # --- 4) awkward dims -> feature-major fallback path ----------------------
    batch2, n2, in2, out2_dim = 16, 100, 12, 20
    kx2, kp2, key = jax.random.split(key, 3)
    x_b = jax.random.normal(kx2, (batch2, n2, in2), jnp.float32)
    w_b, b_b = init_nlinear_params(kp2, in2, out2_dim, n2)
    ref_b = _reference(x_b, w_b, b_b)
    out_b = jax.block_until_ready(nlinear_pallas(x_b, w_b, b_b))
    assert out_b.shape == (batch2, n2, out2_dim)
    assert jnp.allclose(out_b, ref_b, atol=2e-2, rtol=2e-2)

    print("KERNEL_OK")
</pallas_src>

<mosaic_0001>
module attributes {stable_mosaic.version = 11 : i64} {
  func.func @_blockdiag_kernel(%arg0: i32, %arg1: i32, %arg2: memref<32x128xf32, #tpu.memory_space<vmem>>, %arg3: memref<1x128x256xf32, #tpu.memory_space<vmem>>, %arg4: memref<1x256xf32, #tpu.memory_space<vmem>>, %arg5: memref<32x256xf32, #tpu.memory_space<vmem>>) attributes {dimension_semantics = [#tpu.dimension_semantics<parallel>, #tpu.dimension_semantics<arbitrary>], iteration_bounds = array<i64: 3, 1>, scalar_prefetch = 0 : i64, scratch_operands = 0 : i64, tpu.core_type = #tpu.core_type<tc>, window_params = [{transform_indices = @transform_0, window_bounds = array<i64: 32, 128>}, {transform_indices = @transform_1, window_bounds = array<i64: 1, 128, 256>}, {transform_indices = @transform_2, window_bounds = array<i64: 1, 256>}, {transform_indices = @transform_3, window_bounds = array<i64: 32, 256>}]} {
    %c0 = arith.constant 0 : index
    %c0_0 = arith.constant 0 : index
    %0 = vector.load %arg2[%c0, %c0_0] : memref<32x128xf32, #tpu.memory_space<vmem>>, vector<32x128xf32>
    %c0_1 = arith.constant 0 : index
    %c0_2 = arith.constant 0 : index
    %c0_3 = arith.constant 0 : index
    %1 = vector.load %arg3[%c0_1, %c0_2, %c0_3] : memref<1x128x256xf32, #tpu.memory_space<vmem>>, vector<1x128x256xf32>
    %2 = vector.shape_cast %1 : vector<1x128x256xf32> to vector<128x256xf32>
    %cst = arith.constant dense<0.000000e+00> : vector<32x256xf32>
    %3 = tpu.matmul %0, %2, %cst {dimension_numbers = #tpu.dot_dimension_numbers<[1], [0], [0], [1], [0, 0, 1, 1], [], []>} : vector<32x128xf32>, vector<128x256xf32>, vector<32x256xf32> -> vector<32x256xf32>
    %c0_4 = arith.constant 0 : index
    %c0_5 = arith.constant 0 : index
    %4 = vector.load %arg4[%c0_4, %c0_5] : memref<1x256xf32, #tpu.memory_space<vmem>>, vector<1x256xf32>
    %5 = vector.broadcast %4 : vector<1x256xf32> to vector<32x256xf32>
    %6 = arith.addf %3, %5 : vector<32x256xf32>
    %c0_6 = arith.constant 0 : index
    %c0_7 = arith.constant 0 : index
    %7 = vector.load %arg5[%c0_6, %c0_7] : memref<32x256xf32, #tpu.memory_space<vmem>>, vector<32x256xf32>
    tpu.vector_store %arg5[%c0_6, %c0_7], %6 {strides = array<i32>} : memref<32x256xf32, #tpu.memory_space<vmem>>, vector<32x256xf32>,
    return
  }
  func.func @transform_0(%arg0: i32, %arg1: i32) -> (i32, i32) {
    %c0_i32 = arith.constant 0 : i32
    return %arg1, %arg0 : i32, i32
  }
  func.func @transform_1(%arg0: i32, %arg1: i32) -> (i32, i32, i32) {
    %c0_i32 = arith.constant 0 : i32
    %c0_i32_0 = arith.constant 0 : i32
    %c0_i32_1 = arith.constant 0 : i32
    return %arg0, %c0_i32, %c0_i32_0 : i32, i32, i32
  }
  func.func @transform_2(%arg0: i32, %arg1: i32) -> (i32, i32) {
    %c0_i32 = arith.constant 0 : i32
    %c0_i32_0 = arith.constant 0 : i32
    return %c0_i32, %arg0 : i32, i32
  }
  func.func @transform_3(%arg0: i32, %arg1: i32) -> (i32, i32) {
    %c0_i32 = arith.constant 0 : i32
    return %arg1, %arg0 : i32, i32
  }
}

</mosaic_0001>

<llo_original>
// kernel: tpu_custom_call.1
$region0: #{tpu_custom_call.1}
  #allocation0 [shape = 'u32[]', space=smem, size = 0x4, offset = 0x4, fixed_abs, tag = 'smem constant byte address 0x4 - core index']
  #allocation1 [shape = 'u32[72,128]{1,0:T(1,128)}', space=vmem, size = 0x9000, scoped, tag = 'internal scratch']
  %s0 = inlined_call_operand.hbm [shape: f32[32,384], index: 0, kind: input, shape index: {}]
  %s1 = inlined_call_operand.hbm [shape: f32[3,128,256], index: 1, kind: input, shape index: {}]
  %s2 = inlined_call_operand.hbm [shape: f32[1,768], index: 2, kind: input, shape index: {}]
  %s3 = inlined_call_operand.hbm [shape: f32[32,768], index: 3, kind: output, shape index: {}]
  %s4 = sld [smem:[#allocation0]]
  $region57: #{tpu_custom_call.1} parent=0
    _
  %s6 = ssub.s32 1, %s4
  %s7 = scalar_select 0, %s6, %s4
  $region1: #{tpu_custom_call.1} parent=0
    #allocation2 [shape = 'u8[32768]{0}', space=vmem, size = 0x8000, scoped, tag = 'input window, operand 0']
    #allocation3 [shape = 's32[2]{0}', space=sflag, size = 0x8, scoped, tag = 'scoped memory for tpu_custom_call.1']
    #allocation4 [shape = 's32[2]{0}', space=sflag, size = 0x8, scoped, tag = 'scoped memory for tpu_custom_call.1']
    #allocation5 [shape = 'u8[262144]{0}', space=vmem, size = 0x40000, scoped, tag = 'input window, operand 1']
    #allocation6 [shape = 's32[2]{0}', space=sflag, size = 0x8, scoped, tag = 'scoped memory for tpu_custom_call.1']
    #allocation7 [shape = 'u8[2048]{0}', space=vmem, size = 0x800, scoped, tag = 'input window, operand 2']
    #allocation8 [shape = 'u8[65536]{0}', space=vmem, size = 0x10000, scoped, tag = 'output window, operand 0']
    %8 = vsyncpa [#allocation3], 0
    %s9 = scalar_lea.sflag [#allocation3], 1
    %10 = vsyncpa %s9, 0
    %11 = vsyncpa [#allocation6], 0
    %s12 = scalar_lea.sflag [#allocation6], 1
    %13 = vsyncpa %s12, 0
    %14 = vsyncpa [#allocation4], 0
    %s15 = scalar_lea.sflag [#allocation4], 1
    %16 = vsyncpa %s15, 0
    loop: start=0, step=1, limit=5
    $region2: #{tpu_custom_call.1} parent=1 // loop_pre_header
      _
    $region3: #{tpu_custom_call.1} parent=1 // loop_header
      %s18 = sphi 0, %s22
      %p19 = scmp.ge.s32.totalorder %s18, 5
      %s25 = sphi 0, %s37
      %s26 = sphi 0, %s33
      %s27 = sphi 0, %s25
      %s28 = sphi 0, %s26
      %s29 = sphi 0, %s27
      %s30 = sphi 0, %s28
      %s42 = sphi 0, %s44
      %s45 = sphi 0, %s42
      %s46 = sphi 0, %s45
      %s62 = sphi 0, %s46
      %s68 = sphi 0, %s70
      %s71 = sphi 0, %s68
      %s72 = sphi 0, %s71
      %s88 = sphi 0, %s72
      %s94 = sphi 0, %s96
      %s97 = sphi 0, %s94
      %s98 = sphi 0, %s97
      %s114 = sphi 0, %s98
      %s122 = sphi 0, %s124
      %s125 = sphi 0, %s122
      %s126 = sphi 0, %s125
      %s142 = sphi 0, %s126
    $region4: #{tpu_custom_call.1} parent=1 // loop_header_branch
      %21 = sbr.rel (%p19) target = $region8
    $region5: #{tpu_custom_call.1} parent=1 // loop_body
      %s23 = ssub.s32 %s18, 1
      %s24 = ssub.s32 %s18, 2
      %s31 = sadd.s32 1, %s26
      %p32 = scmp.ge.s32.totalorder %s31, 1
      %s33 = scalar_select %p32, 0, %s31
      %s34 = sadd.s32 1, %s25
      %s35 = scalar_select %p32, %s34, %s25
      %p36 = scmp.ge.s32.totalorder %s35, 3
      %s37 = scalar_select %p36, 0, %s35
      %s38 = ssub.s32 %s26, %s33
      %s39 = ssub.s32 %s25, %s37
      %s40 = sor.u32 %s38, %s39
      %p41 = scmp.eq.s32.totalorder %s40, 0
      %s43 = sadd.s32 %s42, 1
      %s44 = scalar_select %p41, %s42, %s43
      %p47 = pneg %p41
      %p48 = scmp.eq.s32.totalorder %s18, 2
      %p49 = por %p47, %p48
      %p50 = scmp.ne.s32.totalorder %s42, %s45
      %p51 = scmp.eq.s32.totalorder %s18, 0
      %p52 = por %p50, %p51
      %p53 = scmp.ne.s32.totalorder %s42, %s45
      %p54 = scmp.eq.s32.totalorder %s23, 2
      %p55 = por %p53, %p54
      %p56 = scmp.ne.s32.totalorder %s45, %s46
      %p57 = scmp.eq.s32.totalorder %s23, 0
      %p58 = por %p56, %p57
      %p59 = scmp.ne.s32.totalorder %s45, %s46
      %p60 = scmp.eq.s32.totalorder %s24, 2
      %p61 = por %p59, %p60
      %p63 = scmp.ne.s32.totalorder %s46, %s62
      %p64 = scmp.eq.s32.totalorder %s24, 0
      %p65 = por %p63, %p64
      %s66 = ssub.s32 %s25, %s37
      %p67 = scmp.eq.s32.totalorder %s66, 0
      %s69 = sadd.s32 %s68, 1
      %s70 = scalar_select %p67, %s68, %s69
      %p73 = pneg %p67
      %p74 = scmp.eq.s32.totalorder %s18, 2
      %p75 = por %p73, %p74
      %p76 = scmp.ne.s32.totalorder %s68, %s71
      %p77 = scmp.eq.s32.totalorder %s18, 0
      %p78 = por %p76, %p77
      %p79 = scmp.ne.s32.totalorder %s68, %s71
      %p80 = scmp.eq.s32.totalorder %s23, 2
      %p81 = por %p79, %p80
      %p82 = scmp.ne.s32.totalorder %s71, %s72
      %p83 = scmp.eq.s32.totalorder %s23, 0
      %p84 = por %p82, %p83
      %p85 = scmp.ne.s32.totalorder %s71, %s72
      %p86 = scmp.eq.s32.totalorder %s24, 2
      %p87 = por %p85, %p86
      %p89 = scmp.ne.s32.totalorder %s72, %s88
      %p90 = scmp.eq.s32.totalorder %s24, 0
      %p91 = por %p89, %p90
      %s92 = ssub.s32 %s25, %s37
      %p93 = scmp.eq.s32.totalorder %s92, 0
      %s95 = sadd.s32 %s94, 1
      %s96 = scalar_select %p93, %s94, %s95
      %p99 = pneg %p93
      %p100 = scmp.eq.s32.totalorder %s18, 2
      %p101 = por %p99, %p100
      %p102 = scmp.ne.s32.totalorder %s94, %s97
      %p103 = scmp.eq.s32.totalorder %s18, 0
      %p104 = por %p102, %p103
      %p105 = scmp.ne.s32.totalorder %s94, %s97
      %p106 = scmp.eq.s32.totalorder %s23, 2
      %p107 = por %p105, %p106
      %p108 = scmp.ne.s32.totalorder %s97, %s98
      %p109 = scmp.eq.s32.totalorder %s23, 0
      %p110 = por %p108, %p109
      %p111 = scmp.ne.s32.totalorder %s97, %s98
      %p112 = scmp.eq.s32.totalorder %s24, 2
      %p113 = por %p111, %p112
      %p115 = scmp.ne.s32.totalorder %s98, %s114
      %p116 = scmp.eq.s32.totalorder %s24, 0
      %p117 = por %p115, %p116
      %s118 = ssub.s32 %s26, %s33
      %s119 = ssub.s32 %s25, %s37
      %s120 = sor.u32 %s118, %s119
      %p121 = scmp.eq.s32.totalorder %s120, 0
      %s123 = sadd.s32 %s122, 1
      %s124 = scalar_select %p121, %s122, %s123
      %p127 = pneg %p121
      %p128 = scmp.eq.s32.totalorder %s18, 2
      %p129 = por %p127, %p128
      %p130 = scmp.ne.s32.totalorder %s122, %s125
      %p131 = scmp.eq.s32.totalorder %s18, 0
      %p132 = por %p130, %p131
      %p133 = scmp.ne.s32.totalorder %s122, %s125
      %p134 = scmp.eq.s32.totalorder %s23, 2
      %p135 = por %p133, %p134
      %p136 = scmp.ne.s32.totalorder %s125, %s126
      %p137 = scmp.eq.s32.totalorder %s23, 0
      %p138 = por %p136, %p137
      %p139 = scmp.ne.s32.totalorder %s125, %s126
      %p140 = scmp.eq.s32.totalorder %s24, 2
      %p141 = por %p139, %p140
      %p143 = scmp.ne.s32.totalorder %s126, %s142
      %p144 = scmp.eq.s32.totalorder %s24, 0
      %p145 = por %p143, %p144
      %p146 = scmp.le.s32.totalorder 1, %s18
      %p147 = scmp.lt.s32.totalorder %s18, 4
      %p148 = pnand %p146, %p147
      %p149 = pneg %p148
      // Predicated region
      $region9: #{tpu_custom_call.1} parent=5 // pred_check
        _
      $region10: #{tpu_custom_call.1} parent=5 // pred_check_branch
        %151 = sbr.rel (%p148) target = $region12
      $region11: #{tpu_custom_call.1} parent=5 // pred_region
        %s152 = ssub.s32 %s18, 1
      $region12: #{tpu_custom_call.1} parent=5 // pred_fallthru
        _
      %p153 = scmp.lt.s32.totalorder %s18, 3
      // Predicated region
      $region13: #{tpu_custom_call.1} parent=5 // pred_check
        %p154 = pneg %p153
      $region14: #{tpu_custom_call.1} parent=5 // pred_check_branch
        %156 = sbr.rel (%p154) target = $region16
      $region15: #{tpu_custom_call.1} parent=5 // pred_region
        // Predicated region
        $region17: #{tpu_custom_call.1} parent=15 // pred_check
          %p157 = pneg %p52
        $region18: #{tpu_custom_call.1} parent=15 // pred_check_branch
          %159 = sbr.rel (%p157) target = $region20
        $region19: #{tpu_custom_call.1} parent=15 // pred_region
          %s160 = sand.u32 %s42, 1
          %s161 = scalar_lea.sflag [#allocation3], %s160
          %s162 = sand.u32 %s42, 1
          %s163 = smul.addr %s162, 32
          %s164 = scalar_lea.vmem [#allocation2], %s163
          %s165 = smul.u32 4, %s26
          %167 = vsyncadd %s161, 0
          %s168 = smul.addr %s165, 3
          %s169 = sadd.s32 %s25, %s168
          %s170 = smul.addr %s169, 8
          %s171 = scalar_lea.hbm %s0, %s170
          %s172 = sshll.u32 %s171, 4
          %s173 = int_to_ptr.hbm [resolvable:$true] %s172
          %s174 = sshll.u32 %s164, 4
          %s175 = int_to_ptr.vmem [resolvable:$true] %s174
          %180 = dma.hbm_to_vmem [thread:$0]  %s173, 512, %s175, %s161, 384, 128, 8
        $region20: #{tpu_custom_call.1} parent=15 // pred_fallthru
          _
        // Predicated region
        $region21: #{tpu_custom_call.1} parent=15 // pred_check
          %p181 = pneg %p78
        $region22: #{tpu_custom_call.1} parent=15 // pred_check_branch
          %183 = sbr.rel (%p181) target = $region24
        $region23: #{tpu_custom_call.1} parent=15 // pred_region
          %s184 = sand.u32 %s18, 1
          %s185 = scalar_lea.sflag [#allocation6], %s184
          %s186 = sand.u32 %s68, 1
          %s187 = smul.addr %s186, 256
          %s188 = scalar_lea.vmem [#allocation5], %s187
          %190 = vsyncadd %s185, 0
          %s191 = smul.addr %s25, 32
          %s192 = smul.addr %s191, 8
          %s193 = scalar_lea.hbm %s1, %s192
          %s194 = sshll.u32 %s193, 4
          %s195 = int_to_ptr.hbm [resolvable:$true] %s194
          %s196 = sshll.u32 %s188, 4
          %s197 = int_to_ptr.vmem [resolvable:$true] %s196
          %202 = dma.hbm_to_vmem [thread:$0]  %s195, 4096, %s197, %s185, 256, 256, 16
        $region24: #{tpu_custom_call.1} parent=15 // pred_fallthru
          _
        // Predicated region
        $region25: #{tpu_custom_call.1} parent=15 // pred_check
          %p203 = pneg %p104
        $region26: #{tpu_custom_call.1} parent=15 // pred_check_branch
          %205 = sbr.rel (%p203) target = $region28
        $region27: #{tpu_custom_call.1} parent=15 // pred_region
          %s206 = sand.u32 %s18, 1
          %s207 = scalar_lea.sflag [#allocation6], %s206
          %s208 = sand.u32 %s94, 1
          %s209 = smul.addr %s208, 2
          %s210 = scalar_lea.vmem [#allocation7], %s209
          %s211 = smul.u32 2, %s25
          %213 = vsyncadd %s207, 0
          %s214 = scalar_lea.hbm %s2, %s211
          %s216 = sshll.u32 %s214, 4
          %s217 = int_to_ptr.hbm [resolvable:$true] %s216
          %s218 = sshll.u32 %s210, 4
          %s219 = int_to_ptr.vmem [resolvable:$true] %s218
          %221 = dma.hbm_to_vmem [thread:$0]  %s217, 32, %s219, %s207
        $region28: #{tpu_custom_call.1} parent=15 // pred_fallthru
          _
      $region16: #{tpu_custom_call.1} parent=5 // pred_fallthru
        _
      %p222 = scmp.le.s32.totalorder 1, %s18
      %p223 = scmp.lt.s32.totalorder %s18, 4
      %p224 = pnand %p222, %p223
      %p225 = pneg %p224
      // Predicated region
      $region29: #{tpu_custom_call.1} parent=5 // pred_check
        _
      $region30: #{tpu_custom_call.1} parent=5 // pred_check_branch
        %227 = sbr.rel (%p224) target = $region32
      $region31: #{tpu_custom_call.1} parent=5 // pred_region
        %s228 = ssub.s32 %s18, 1
        %s229 = sand.u32 %s45, 1
        %s230 = scalar_lea.sflag [#allocation3], %s229
        %s231 = sand.u32 %s45, 1
        %s232 = smul.addr %s231, 32
        %s233 = scalar_lea.vmem [#allocation2], %s232
        // Predicated region
        $region33: #{tpu_custom_call.1} parent=31 // pred_check
          %p234 = pneg %p58
        $region34: #{tpu_custom_call.1} parent=31 // pred_check_branch
          %236 = sbr.rel (%p234) target = $region36
        $region35: #{tpu_custom_call.1} parent=31 // pred_region
          %238 = dma.done %s230, 512
        $region36: #{tpu_custom_call.1} parent=31 // pred_fallthru
          _
        %s239 = sand.u32 %s23, 1
        %s240 = scalar_lea.sflag [#allocation6], %s239
        %s241 = sand.u32 %s71, 1
        %s242 = smul.addr %s241, 256
        %s243 = scalar_lea.vmem [#allocation5], %s242
        // Predicated region
        $region37: #{tpu_custom_call.1} parent=31 // pred_check
          %p244 = pneg %p84
        $region38: #{tpu_custom_call.1} parent=31 // pred_check_branch
          %246 = sbr.rel (%p244) target = $region40
        $region39: #{tpu_custom_call.1} parent=31 // pred_region
          %248 = dma.done %s240, 4096
        $region40: #{tpu_custom_call.1} parent=31 // pred_fallthru
          _
        %s249 = sand.u32 %s23, 1
        %s250 = scalar_lea.sflag [#allocation6], %s249
        %s251 = sand.u32 %s97, 1
        %s252 = smul.addr %s251, 2
        %s253 = scalar_lea.vmem [#allocation7], %s252
        // Predicated region
        $region41: #{tpu_custom_call.1} parent=31 // pred_check
          %p254 = pneg %p110
        $region42: #{tpu_custom_call.1} parent=31 // pred_check_branch
          %256 = sbr.rel (%p254) target = $region44
        $region43: #{tpu_custom_call.1} parent=31 // pred_region
          %258 = dma.done %s250, 32
        $region44: #{tpu_custom_call.1} parent=31 // pred_fallthru
          _
        %s259 = sand.u32 %s45, 1
        %s260 = scalar_lea.sflag [#allocation3], %s259
        %s261 = sand.u32 %s45, 1
        %s262 = smul.addr %s261, 32
        %s263 = scalar_lea.vmem [#allocation2], %s262
        %p264 = pneg %p58
        %p265 = pneg %p55
        %s266 = sand.u32 %s23, 1
        %s267 = scalar_lea.sflag [#allocation6], %s266
        %s268 = sand.u32 %s71, 1
        %s269 = smul.addr %s268, 256
        %s270 = scalar_lea.vmem [#allocation5], %s269
        %p271 = pneg %p84
        %p272 = pneg %p81
        %s273 = sand.u32 %s23, 1
        %s274 = scalar_lea.sflag [#allocation6], %s273
        %s275 = sand.u32 %s97, 1
        %s276 = smul.addr %s275, 2
        %s277 = scalar_lea.vmem [#allocation7], %s276
        %p278 = pneg %p110
        %p279 = pneg %p107
        %p280 = pneg %p138
        %p281 = pneg %p135
        %s282 = sand.u32 %s125, 1
        %s283 = scalar_lea.sflag [#allocation4], %s282
        %s284 = sand.u32 %s125, 1
        %s285 = smul.addr %s284, 64
        %s286 = scalar_lea.vmem [#allocation8], %s285
        %s287 = smul.u32 4, %s28
        %s288 = smul.u32 2, %s27
        %s289 = smul.u32 4, %s28
        %s290 = smul.u32 2, %s27
        %v291 = vld [vmem:[%s233] sm:$0xff]
        %v292 = vld [vmem:[%s233 + $0x8] sm:$0xff]
        %v293 = vld [vmem:[%s233 + $0x10] sm:$0xff]
        %v294 = vld [vmem:[%s233 + $0x18] sm:$0xff]
        %v295 = vld [vmem:[%s243] sm:$0xff]
        %v296 = vld [vmem:[%s243 + $0x8] sm:$0xff]
        %v297 = vld [vmem:[%s243 + $0x10] sm:$0xff]
        %v298 = vld [vmem:[%s243 + $0x18] sm:$0xff]
        %v299 = vld [vmem:[%s243 + $0x20] sm:$0xff]
        %v300 = vld [vmem:[%s243 + $0x28] sm:$0xff]
        %v301 = vld [vmem:[%s243 + $0x30] sm:$0xff]
        %v302 = vld [vmem:[%s243 + $0x38] sm:$0xff]
        %v303 = vld [vmem:[%s243 + $0x40] sm:$0xff]
        %v304 = vld [vmem:[%s243 + $0x48] sm:$0xff]
        %v305 = vld [vmem:[%s243 + $0x50] sm:$0xff]
        %v306 = vld [vmem:[%s243 + $0x58] sm:$0xff]
        %v307 = vld [vmem:[%s243 + $0x60] sm:$0xff]
        %v308 = vld [vmem:[%s243 + $0x68] sm:$0xff]
        %v309 = vld [vmem:[%s243 + $0x70] sm:$0xff]
        %v310 = vld [vmem:[%s243 + $0x78] sm:$0xff]
        %v311 = vld [vmem:[%s243 + $0x80] sm:$0xff]
        %v312 = vld [vmem:[%s243 + $0x88] sm:$0xff]
        %v313 = vld [vmem:[%s243 + $0x90] sm:$0xff]
        %v314 = vld [vmem:[%s243 + $0x98] sm:$0xff]
        %v315 = vld [vmem:[%s243 + $0xa0] sm:$0xff]
        %v316 = vld [vmem:[%s243 + $0xa8] sm:$0xff]
        %v317 = vld [vmem:[%s243 + $0xb0] sm:$0xff]
        %v318 = vld [vmem:[%s243 + $0xb8] sm:$0xff]
        %v319 = vld [vmem:[%s243 + $0xc0] sm:$0xff]
        %v320 = vld [vmem:[%s243 + $0xc8] sm:$0xff]
        %v321 = vld [vmem:[%s243 + $0xd0] sm:$0xff]
        %v322 = vld [vmem:[%s243 + $0xd8] sm:$0xff]
        %v323 = vld [vmem:[%s243 + $0xe0] sm:$0xff]
        %v324 = vld [vmem:[%s243 + $0xe8] sm:$0xff]
        %v325 = vld [vmem:[%s243 + $0xf0] sm:$0xff]
        %v326 = vld [vmem:[%s243 + $0xf8] sm:$0xff]
        %v327 = vld [vmem:[%s253] sm:$0x3]
        %v329 = vperm.slane %v327, 0
        %v330 = vperm.slane %v327, 1
        %333 = vmatpush.msra.mxu0 %v325
        %334 = vmatpush.msra.mxu0 %v323
        %335 = vmatpush.msra.mxu0 %v321
        %336 = vmatpush.msra.mxu0 %v319
        %337 = vmatpush.msra.mxu0 %v317
        %338 = vmatpush.msra.mxu0 %v315
        %339 = vmatpush.msra.mxu0 %v313
        %340 = vmatpush.msra.mxu0 %v311
        %341 = vmatpush.msra.mxu0 %v309
        %342 = vmatpush.msra.mxu0 %v307
        %343 = vmatpush.msra.mxu0 %v305
        %344 = vmatpush.msra.mxu0 %v303
        %345 = vmatpush.msra.mxu0 %v301
        %346 = vmatpush.msra.mxu0 %v299
        %347 = vmatpush.msra.mxu0 %v297
        %348 = vmatpush.msra.mxu0 %v295
        %349 = vmatmul.f32.gmra.mxu0 %v291
        %v350 = vpop.f32.mrf.mxu0
        %v351 = vadd.f32 %v329, %v350
        %352 = vmatmul.f32.gmra.mxu0 %v292
        %v353 = vpop.f32.mrf.mxu0
        %v354 = vadd.f32 %v329, %v353
        %355 = vmatmul.f32.gmra.mxu0 %v293
        %v356 = vpop.f32.mrf.mxu0
        %v357 = vadd.f32 %v329, %v356
        %358 = vmatmul.f32.gmra.mxu0 %v294
        %v359 = vpop.f32.mrf.mxu0
        %v360 = vadd.f32 %v329, %v359
        %361 = vdwg.mxu0
        %362 = vmatpush.msra.mxu0 %v326
        %363 = vmatpush.msra.mxu0 %v324
        %364 = vmatpush.msra.mxu0 %v322
        %365 = vmatpush.msra.mxu0 %v320
        %366 = vmatpush.msra.mxu0 %v318
        %367 = vmatpush.msra.mxu0 %v316
        %368 = vmatpush.msra.mxu0 %v314
        %369 = vmatpush.msra.mxu0 %v312
        %370 = vmatpush.msra.mxu0 %v310
        %371 = vmatpush.msra.mxu0 %v308
        %372 = vmatpush.msra.mxu0 %v306
        %373 = vmatpush.msra.mxu0 %v304
        %374 = vmatpush.msra.mxu0 %v302
        %375 = vmatpush.msra.mxu0 %v300
        %376 = vmatpush.msra.mxu0 %v298
        %377 = vmatpush.msra.mxu0 %v296
        %378 = vmatmul.f32.gmra.mxu0 %v291
        %v379 = vpop.f32.mrf.mxu0
        %v380 = vadd.f32 %v330, %v379
        %381 = vmatmul.f32.gmra.mxu0 %v292
        %v382 = vpop.f32.mrf.mxu0
        %v383 = vadd.f32 %v330, %v382
        %384 = vmatmul.f32.gmra.mxu0 %v293
        %v385 = vpop.f32.mrf.mxu0
        %v386 = vadd.f32 %v330, %v385
        %387 = vmatmul.f32.gmra.mxu0 %v294
        %v388 = vpop.f32.mrf.mxu0
        %v389 = vadd.f32 %v330, %v388
        %390 = vdwg.mxu0
        %391 = vst [vmem:[%s286] sm:$0xff] %v351
        %392 = vst [vmem:[%s286 + $0x8] sm:$0xff] %v380
        %393 = vst [vmem:[%s286 + $0x10] sm:$0xff] %v354
        %394 = vst [vmem:[%s286 + $0x18] sm:$0xff] %v383
        %395 = vst [vmem:[%s286 + $0x20] sm:$0xff] %v357
        %396 = vst [vmem:[%s286 + $0x28] sm:$0xff] %v386
        %397 = vst [vmem:[%s286 + $0x30] sm:$0xff] %v360
        %398 = vst [vmem:[%s286 + $0x38] sm:$0xff] %v389
        %s399 = sand.u32 %s125, 1
        %s400 = scalar_lea.sflag [#allocation4], %s399
        %s401 = sand.u32 %s125, 1
        %s402 = smul.addr %s401, 64
        %s403 = scalar_lea.vmem [#allocation8], %s402
        // Predicated region
        $region45: #{tpu_custom_call.1} parent=31 // pred_check
          %p404 = pneg %p135
        $region46: #{tpu_custom_call.1} parent=31 // pred_check_branch
          %406 = sbr.rel (%p404) target = $region48
        $region47: #{tpu_custom_call.1} parent=31 // pred_region
          %s407 = smul.u32 4, %s28
          %s408 = smul.u32 2, %s27
          %410 = vsyncadd %s400, 0
          %s411 = smul.addr %s407, 6
          %s412 = sadd.s32 %s408, %s411
          %s413 = smul.addr %s412, 8
          %s414 = scalar_lea.hbm %s3, %s413
          %s415 = sshll.u32 %s403, 4
          %s416 = int_to_ptr.vmem [resolvable:$true] %s415
          %s417 = sshll.u32 %s414, 4
          %s418 = int_to_ptr.hbm [resolvable:$true] %s417
          %423 = dma.vmem_to_hbm [thread:$0]  %s416, 1024, %s418, %s400, 256, 768, 16
        $region48: #{tpu_custom_call.1} parent=31 // pred_fallthru
          _
      $region32: #{tpu_custom_call.1} parent=5 // pred_fallthru
        _
      %p424 = scmp.le.s32.totalorder 2, %s18
      // Predicated region
      $region49: #{tpu_custom_call.1} parent=5 // pred_check
        %p425 = pneg %p424
      $region50: #{tpu_custom_call.1} parent=5 // pred_check_branch
        %427 = sbr.rel (%p425) target = $region52
      $region51: #{tpu_custom_call.1} parent=5 // pred_region
        %s428 = ssub.s32 %s18, 2
        // Predicated region
        $region53: #{tpu_custom_call.1} parent=51 // pred_check
          %p429 = pneg %p141
        $region54: #{tpu_custom_call.1} parent=51 // pred_check_branch
          %431 = sbr.rel (%p429) target = $region56
        $region55: #{tpu_custom_call.1} parent=51 // pred_region
          %s432 = sand.u32 %s126, 1
          %s433 = scalar_lea.sflag [#allocation4], %s432
          %s434 = sand.u32 %s126, 1
          %s435 = smul.addr %s434, 64
          %s436 = scalar_lea.vmem [#allocation8], %s435
          %438 = dma.done %s433, 1024
        $region56: #{tpu_custom_call.1} parent=51 // pred_fallthru
          _
      $region52: #{tpu_custom_call.1} parent=5 // pred_fallthru
        _
    $region6: #{tpu_custom_call.1} parent=1 // loop_footer
      %s22 = sadd.s32 1, %s18
    $region7: #{tpu_custom_call.1} parent=1 // loop_footer_branch
      %17 = sbr.rel target = $region3
    $region8: #{tpu_custom_call.1} parent=1 // loop_exit
      _
    %439 = vsyncpa [#allocation3], 1
    %s440 = scalar_lea.sflag [#allocation3], 1
    %441 = vsyncpa %s440, 1
    %442 = vsyncpa [#allocation6], 1
    %s443 = scalar_lea.sflag [#allocation6], 1
    %444 = vsyncpa %s443, 1
    %445 = vsyncpa [#allocation4], 1
    %s446 = scalar_lea.sflag [#allocation4], 1
    %447 = vsyncpa %s446, 1

</llo_original>
